<compile_context>
chip_gen: v6e
topology: v6e:2x2x1
jax: 0.10.0
libtpu: 0.0.40
codegen_flags: <defaults>
</compile_context>

<pallas_src>
import functools

import jax
import jax.numpy as jnp
from jax.experimental import pallas as pl
from jax.experimental.pallas import tpu as pltpu


def _round_up(a, b):
    return (a + b - 1) // b * b


def _stable_softplus(x):
    return jnp.maximum(x, 0.0) + jnp.log1p(jnp.exp(-jnp.abs(x)))


def _mlp_kernel(x_ref, w_in_ref, b_in_ref, w_hid_ref, b_hid_ref,
                w_out_ref, b_out_ref, o_ref, *,
                n_hidden, apply_softplus, compute_dtype, approx_recip):
    def silu(v):
        # numerically stable sigmoid: exp(-|v|) never overflows (EUP op);
        # reciprocal optionally routed to the EUP as well (frees VALU slots).
        z = jnp.exp(-jnp.abs(v))
        denom = 1.0 + z
        if approx_recip:
            r = pl.reciprocal(denom, approx=True)
        else:
            r = 1.0 / denom
        sig = jnp.where(v >= 0, r, 1.0 - r)
        return v * sig

    # input layer (K = nIn is tiny; MXU handles the ragged K dim fine)
    h = jnp.dot(x_ref[...], w_in_ref[...],
                preferred_element_type=jnp.float32) + b_in_ref[...]
    h = silu(h)

    # hidden-to-hidden layers (static unroll; weights stacked on leading axis)
    for l in range(n_hidden):
        h = jnp.dot(h.astype(compute_dtype), w_hid_ref[l],
                    preferred_element_type=jnp.float32) + b_hid_ref[l]
        h = silu(h)

    # output layer (N padded to a lane-dense 128 multiple by the wrapper)
    out = jnp.dot(h.astype(compute_dtype), w_out_ref[...],
                  preferred_element_type=jnp.float32) + b_out_ref[...]
    if apply_softplus:
        out = _stable_softplus(out)
    o_ref[...] = out.astype(o_ref.dtype)


def init_params(key, n_in, n_out, n_nodes=128, n_layers=5, dtype=jnp.float32):
    """Deterministic init mimicking PyTorch's default Linear init
    (uniform(-1/sqrt(fan_in), 1/sqrt(fan_in)))."""
    keys = jax.random.split(key, 2 * (n_layers + 1))

    def lin(kw, kb, fan_in, fan_out):
        bound = 1.0 / jnp.sqrt(jnp.asarray(fan_in, dtype))
        w = jax.random.uniform(kw, (fan_in, fan_out), dtype, -bound, bound)
        b = jax.random.uniform(kb, (fan_out,), dtype, -bound, bound)
        return w, b

    w_in, b_in = lin(keys[0], keys[1], n_in, n_nodes)
    w_hid, b_hid = [], []
    for i in range(n_layers - 1):
        w, b = lin(keys[2 + 2 * i], keys[3 + 2 * i], n_nodes, n_nodes)
        w_hid.append(w)
        b_hid.append(b)
    w_out, b_out = lin(keys[-2], keys[-1], n_nodes, n_out)
    return dict(
        w_in=w_in, b_in=b_in.reshape(1, n_nodes),
        w_hid=jnp.stack(w_hid, axis=0),          # (n_layers-1, n_nodes, n_nodes)
        b_hid=jnp.stack(b_hid, axis=0),          # (n_layers-1, n_nodes)
        w_out=w_out, b_out=b_out.reshape(1, n_out),
    )


def mlp_forward(x, params, output='none', batch_tile=512,
                compute_dtype=jnp.float32, approx_recip=None):
    """Pallas forward pass of `net`.

    x: (B, nIn) float32.
    batch_tile: rows per grid step (sweep 256-1024; multiples of 256 fill the
        v6e/v7x 256-wide MXU; it is clamped to the padded batch for small B).
    compute_dtype: jnp.float32 (default, v5e-safe) or jnp.bfloat16
        (v6e/v7x MXU peak); accumulation is always f32.
    """
    B, n_in = x.shape
    n_nodes = params['w_in'].shape[1]
    n_hidden = params['w_hid'].shape[0]
    n_out = params['w_out'].shape[1]

    if approx_recip is None:
        approx_recip = (compute_dtype == jnp.bfloat16)

    # ---- batch tiling: pad B up to a multiple of the tile ------------------
    bt = batch_tile
    if B <= bt:
        bt = max(8, _round_up(B, 8))          # don't over-pad tiny batches
    B_pad = _round_up(B, bt)
    x_p = x if B_pad == B else jnp.pad(x, ((0, B_pad - B), (0, 0)))
    x_p = x_p.astype(compute_dtype)

    # ---- lane-dense output: pad nOut up to a multiple of 128 ---------------
    n_out_p = max(128, _round_up(n_out, 128))
    w_out = params['w_out']
    b_out = params['b_out']
    if n_out_p != n_out:
        w_out = jnp.pad(w_out, ((0, 0), (0, n_out_p - n_out)))
        b_out = jnp.pad(b_out, ((0, 0), (0, n_out_p - n_out)))

    # weights in compute dtype (bf16 on v6e/v7x), biases stay f32
    w_in = params['w_in'].astype(compute_dtype)
    w_hid = params['w_hid'].astype(compute_dtype)
    w_out = w_out.astype(compute_dtype)
    b_in = params['b_in'].astype(jnp.float32)
    b_hid = params['b_hid'].astype(jnp.float32)
    b_out = b_out.astype(jnp.float32)

    kernel = functools.partial(
        _mlp_kernel,
        n_hidden=n_hidden,
        apply_softplus=(output == 'softplus'),
        compute_dtype=compute_dtype,
        approx_recip=approx_recip,
    )

    # weights/biases: constant block index -> fetched once, never re-DMA'd
    full = lambda *shape: pl.BlockSpec(shape, lambda i: (0,) * len(shape))

    itemsize = jnp.dtype(compute_dtype).itemsize
    flops = 2 * B_pad * (n_in * n_nodes
                         + n_hidden * n_nodes * n_nodes
                         + n_nodes * n_out_p)
    transcendentals = B_pad * n_nodes * (n_hidden + 1) \
        + (B_pad * n_out_p if output == 'softplus' else 0)
    bytes_accessed = (B_pad * n_in * itemsize
                      + (n_in * n_nodes + n_hidden * n_nodes * n_nodes
                         + n_nodes * n_out_p) * itemsize
                      + (n_nodes * (n_hidden + 1) + n_out_p) * 4
                      + B_pad * n_out_p * 4)

    y_full = pl.pallas_call(
        kernel,
        out_shape=jax.ShapeDtypeStruct((B_pad, n_out_p), jnp.float32),
        grid_spec=pltpu.PrefetchScalarGridSpec(
            num_scalar_prefetch=0,
            grid=(B_pad // bt,),
            in_specs=[
                pl.BlockSpec((bt, n_in), lambda i: (i, 0)),   # x tile
                full(n_in, n_nodes),                          # w_in
                full(1, n_nodes),                             # b_in
                full(n_hidden, n_nodes, n_nodes),             # w_hid
                full(n_hidden, n_nodes),                      # b_hid
                full(n_nodes, n_out_p),                       # w_out (padded)
                full(1, n_out_p),                             # b_out (padded)
            ],
            out_specs=pl.BlockSpec((bt, n_out_p), lambda i: (i, 0)),
        ),
        compiler_params=pltpu.CompilerParams(
            dimension_semantics=("parallel",)),
        cost_estimate=pl.CostEstimate(
            flops=int(flops),
            transcendentals=int(transcendentals),
            bytes_accessed=int(bytes_accessed)),
    )(x_p, w_in, b_in, w_hid, b_hid, w_out, b_out)

    return y_full[:B, :n_out]


def mlp_reference(x, params, output='none', compute_dtype=jnp.float32):
    """Pure-JAX reference (mirrors the PyTorch forward; optional bf16 mirror)."""
    cd = compute_dtype

    def dot(a, w):
        return jnp.dot(a.astype(cd), w.astype(cd),
                       preferred_element_type=jnp.float32)

    def silu(v):
        return v * jax.nn.sigmoid(v)

    h = silu(dot(x, params['w_in']) + params['b_in'])
    for l in range(params['w_hid'].shape[0]):
        h = silu(dot(h, params['w_hid'][l]) + params['b_hid'][l])
    h = dot(h, params['w_out']) + params['b_out']
    if output == 'softplus':
        h = _stable_softplus(h)
    return h


if __name__ == "__main__":
    key = jax.random.PRNGKey(0)
    k_param, k_x1, k_x2 = jax.random.split(key, 3)

    # shapes consistent with the module: nIn=4, nOut=3, n_nodes=128, n_layers=5
    n_in, n_out, n_nodes, n_layers = 4, 3, 128, 5
    params = init_params(k_param, n_in, n_out, n_nodes, n_layers)

    # 1) small batch, f32, both output modes -> tight correctness check
    x_small = jax.random.normal(k_x1, (8, n_in), dtype=jnp.float32)
    for mode in ("none", "softplus"):
        y = jax.block_until_ready(mlp_forward(x_small, params, output=mode))
        y_ref = mlp_reference(x_small, params, output=mode)
        assert y.shape == (8, n_out)
        assert jnp.allclose(y, y_ref, atol=1e-5, rtol=1e-5), f"mismatch ({mode})"

    # 2) batch not a multiple of the tile -> exercises batch zero-padding,
    #    128-lane output padding, and a 2-step grid (keeps both v7x TCs busy)
    x_med = jax.random.normal(k_x2, (300, n_in), dtype=jnp.float32)
    y = jax.block_until_ready(
        mlp_forward(x_med, params, output="softplus", batch_tile=256))
    y_ref = mlp_reference(x_med, params, output="softplus")
    assert y.shape == (300, n_out)
    assert jnp.allclose(y, y_ref, atol=1e-5, rtol=1e-5), "mismatch (padded/grid)"

    # 3) bf16 compute path (v6e/v7x MXU peak), f32 accumulation
    y_bf = jax.block_until_ready(
        mlp_forward(x_med, params, output="none",
                    batch_tile=256, compute_dtype=jnp.bfloat16))
    y_bf_ref = mlp_reference(x_med, params, output="none",
                             compute_dtype=jnp.bfloat16)
    assert y_bf.shape == (300, n_out)
    assert jnp.allclose(y_bf, y_bf_ref, atol=2e-2, rtol=2e-2), "mismatch (bf16)"

    print("KERNEL_OK")
</pallas_src>

<mosaic_0001>
module attributes {stable_mosaic.version = 11 : i64} {
  func.func @_mlp_kernel(%arg0: i32, %arg1: memref<8x4xf32, #tpu.memory_space<vmem>>, %arg2: memref<4x128xf32, #tpu.memory_space<vmem>>, %arg3: memref<1x128xf32, #tpu.memory_space<vmem>>, %arg4: memref<4x128x128xf32, #tpu.memory_space<vmem>>, %arg5: memref<4x128xf32, #tpu.memory_space<vmem>>, %arg6: memref<128x128xf32, #tpu.memory_space<vmem>>, %arg7: memref<1x128xf32, #tpu.memory_space<vmem>>, %arg8: memref<8x128xf32, #tpu.memory_space<vmem>>) attributes {dimension_semantics = [#tpu.dimension_semantics<parallel>], iteration_bounds = array<i64: 1>, scalar_prefetch = 0 : i64, scratch_operands = 0 : i64, tpu.core_type = #tpu.core_type<tc>, window_params = [{transform_indices = @transform_0, window_bounds = array<i64: 8, 4>}, {pipeline_mode = #tpu.pipeline_mode<synchronous>, transform_indices = @transform_1, window_bounds = array<i64: 4, 128>}, {pipeline_mode = #tpu.pipeline_mode<synchronous>, transform_indices = @transform_2, window_bounds = array<i64: 1, 128>}, {pipeline_mode = #tpu.pipeline_mode<synchronous>, transform_indices = @transform_3, window_bounds = array<i64: 4, 128, 128>}, {pipeline_mode = #tpu.pipeline_mode<synchronous>, transform_indices = @transform_4, window_bounds = array<i64: 4, 128>}, {pipeline_mode = #tpu.pipeline_mode<synchronous>, transform_indices = @transform_5, window_bounds = array<i64: 128, 128>}, {pipeline_mode = #tpu.pipeline_mode<synchronous>, transform_indices = @transform_6, window_bounds = array<i64: 1, 128>}, {transform_indices = @transform_7, window_bounds = array<i64: 8, 128>}]} {
    %c0 = arith.constant 0 : index
    %c0_0 = arith.constant 0 : index
    %0 = vector.load %arg1[%c0, %c0_0] : memref<8x4xf32, #tpu.memory_space<vmem>>, vector<8x4xf32>
    %c0_1 = arith.constant 0 : index
    %c0_2 = arith.constant 0 : index
    %1 = vector.load %arg2[%c0_1, %c0_2] : memref<4x128xf32, #tpu.memory_space<vmem>>, vector<4x128xf32>
    %cst = arith.constant dense<0.000000e+00> : vector<8x128xf32>
    %2 = tpu.matmul %0, %1, %cst {dimension_numbers = #tpu.dot_dimension_numbers<[1], [0], [0], [1], [0, 0, 1, 1], [], []>} : vector<8x4xf32>, vector<4x128xf32>, vector<8x128xf32> -> vector<8x128xf32>
    %c0_3 = arith.constant 0 : index
    %c0_4 = arith.constant 0 : index
    %3 = vector.load %arg3[%c0_3, %c0_4] : memref<1x128xf32, #tpu.memory_space<vmem>>, vector<1x128xf32>
    %4 = vector.broadcast %3 : vector<1x128xf32> to vector<8x128xf32>
    %5 = arith.addf %2, %4 : vector<8x128xf32>
    %6 = math.absf %5 : vector<8x128xf32>
    %cst_5 = arith.constant 0.000000e+00 : f32
    %7 = vector.broadcast %cst_5 : f32 to vector<8x128xf32>
    %8 = arith.subf %7, %6 : vector<8x128xf32>
    %9 = math.exp %8 : vector<8x128xf32>
    %cst_6 = arith.constant 1.000000e+00 : f32
    %10 = vector.broadcast %cst_6 : f32 to vector<8x128xf32>
    %11 = arith.addf %10, %9 : vector<8x128xf32>
    %cst_7 = arith.constant 1.000000e+00 : f32
    %12 = vector.broadcast %cst_7 : f32 to vector<8x128xf32>
    %13 = arith.divf %12, %11 : vector<8x128xf32>
    %cst_8 = arith.constant 0.000000e+00 : f32
    %14 = vector.broadcast %cst_8 : f32 to vector<8x128xf32>
    %15 = arith.cmpf oge, %5, %14 : vector<8x128xf32>
    %cst_9 = arith.constant 1.000000e+00 : f32
    %16 = vector.broadcast %cst_9 : f32 to vector<8x128xf32>
    %17 = arith.subf %16, %13 : vector<8x128xf32>
    %18 = arith.select %15, %13, %17 : vector<8x128xi1>, vector<8x128xf32>
    %19 = arith.mulf %5, %18 : vector<8x128xf32>
    %c0_10 = arith.constant 0 : index
    %c0_11 = arith.constant 0 : index
    %c0_12 = arith.constant 0 : index
    %20 = vector.load %arg4[%c0_10, %c0_11, %c0_12] : memref<4x128x128xf32, #tpu.memory_space<vmem>>, vector<1x128x128xf32>
    %21 = vector.shape_cast %20 : vector<1x128x128xf32> to vector<128x128xf32>
    %cst_13 = arith.constant dense<0.000000e+00> : vector<8x128xf32>
    %22 = tpu.matmul %19, %21, %cst_13 {dimension_numbers = #tpu.dot_dimension_numbers<[1], [0], [0], [1], [0, 0, 1, 1], [], []>} : vector<8x128xf32>, vector<128x128xf32>, vector<8x128xf32> -> vector<8x128xf32>
    %c0_14 = arith.constant 0 : index
    %c0_15 = arith.constant 0 : index
    %23 = vector.load %arg5[%c0_14, %c0_15] : memref<4x128xf32, #tpu.memory_space<vmem>>, vector<1x128xf32>
    %24 = vector.shape_cast %23 : vector<1x128xf32> to vector<128xf32>
    %25 = vector.shape_cast %24 : vector<128xf32> to vector<1x128xf32>
    %26 = vector.broadcast %25 : vector<1x128xf32> to vector<8x128xf32>
    %27 = arith.addf %22, %26 : vector<8x128xf32>
    %28 = math.absf %27 : vector<8x128xf32>
    %cst_16 = arith.constant 0.000000e+00 : f32
    %29 = vector.broadcast %cst_16 : f32 to vector<8x128xf32>
    %30 = arith.subf %29, %28 : vector<8x128xf32>
    %31 = math.exp %30 : vector<8x128xf32>
    %cst_17 = arith.constant 1.000000e+00 : f32
    %32 = vector.broadcast %cst_17 : f32 to vector<8x128xf32>
    %33 = arith.addf %32, %31 : vector<8x128xf32>
    %cst_18 = arith.constant 1.000000e+00 : f32
    %34 = vector.broadcast %cst_18 : f32 to vector<8x128xf32>
    %35 = arith.divf %34, %33 : vector<8x128xf32>
    %cst_19 = arith.constant 0.000000e+00 : f32
    %36 = vector.broadcast %cst_19 : f32 to vector<8x128xf32>
    %37 = arith.cmpf oge, %27, %36 : vector<8x128xf32>
    %cst_20 = arith.constant 1.000000e+00 : f32
    %38 = vector.broadcast %cst_20 : f32 to vector<8x128xf32>
    %39 = arith.subf %38, %35 : vector<8x128xf32>
    %40 = arith.select %37, %35, %39 : vector<8x128xi1>, vector<8x128xf32>
    %41 = arith.mulf %27, %40 : vector<8x128xf32>
    %c1 = arith.constant 1 : index
    %c0_21 = arith.constant 0 : index
    %c0_22 = arith.constant 0 : index
    %42 = vector.load %arg4[%c1, %c0_21, %c0_22] : memref<4x128x128xf32, #tpu.memory_space<vmem>>, vector<1x128x128xf32>
    %43 = vector.shape_cast %42 : vector<1x128x128xf32> to vector<128x128xf32>
    %cst_23 = arith.constant dense<0.000000e+00> : vector<8x128xf32>
    %44 = tpu.matmul %41, %43, %cst_23 {dimension_numbers = #tpu.dot_dimension_numbers<[1], [0], [0], [1], [0, 0, 1, 1], [], []>} : vector<8x128xf32>, vector<128x128xf32>, vector<8x128xf32> -> vector<8x128xf32>
    %c1_24 = arith.constant 1 : index
    %c0_25 = arith.constant 0 : index
    %45 = vector.load %arg5[%c1_24, %c0_25] : memref<4x128xf32, #tpu.memory_space<vmem>>, vector<1x128xf32>
    %46 = vector.shape_cast %45 : vector<1x128xf32> to vector<128xf32>
    %47 = vector.shape_cast %46 : vector<128xf32> to vector<1x128xf32>
    %48 = vector.broadcast %47 : vector<1x128xf32> to vector<8x128xf32>
    %49 = arith.addf %44, %48 : vector<8x128xf32>
    %50 = math.absf %49 : vector<8x128xf32>
    %cst_26 = arith.constant 0.000000e+00 : f32
    %51 = vector.broadcast %cst_26 : f32 to vector<8x128xf32>
    %52 = arith.subf %51, %50 : vector<8x128xf32>
    %53 = math.exp %52 : vector<8x128xf32>
    %cst_27 = arith.constant 1.000000e+00 : f32
    %54 = vector.broadcast %cst_27 : f32 to vector<8x128xf32>
    %55 = arith.addf %54, %53 : vector<8x128xf32>
    %cst_28 = arith.constant 1.000000e+00 : f32
    %56 = vector.broadcast %cst_28 : f32 to vector<8x128xf32>
    %57 = arith.divf %56, %55 : vector<8x128xf32>
    %cst_29 = arith.constant 0.000000e+00 : f32
    %58 = vector.broadcast %cst_29 : f32 to vector<8x128xf32>
    %59 = arith.cmpf oge, %49, %58 : vector<8x128xf32>
    %cst_30 = arith.constant 1.000000e+00 : f32
    %60 = vector.broadcast %cst_30 : f32 to vector<8x128xf32>
    %61 = arith.subf %60, %57 : vector<8x128xf32>
    %62 = arith.select %59, %57, %61 : vector<8x128xi1>, vector<8x128xf32>
    %63 = arith.mulf %49, %62 : vector<8x128xf32>
    %c2 = arith.constant 2 : index
    %c0_31 = arith.constant 0 : index
    %c0_32 = arith.constant 0 : index
    %64 = vector.load %arg4[%c2, %c0_31, %c0_32] : memref<4x128x128xf32, #tpu.memory_space<vmem>>, vector<1x128x128xf32>
    %65 = vector.shape_cast %64 : vector<1x128x128xf32> to vector<128x128xf32>
    %cst_33 = arith.constant dense<0.000000e+00> : vector<8x128xf32>
    %66 = tpu.matmul %63, %65, %cst_33 {dimension_numbers = #tpu.dot_dimension_numbers<[1], [0], [0], [1], [0, 0, 1, 1], [], []>} : vector<8x128xf32>, vector<128x128xf32>, vector<8x128xf32> -> vector<8x128xf32>
    %c2_34 = arith.constant 2 : index
    %c0_35 = arith.constant 0 : index
    %67 = vector.load %arg5[%c2_34, %c0_35] : memref<4x128xf32, #tpu.memory_space<vmem>>, vector<1x128xf32>
    %68 = vector.shape_cast %67 : vector<1x128xf32> to vector<128xf32>
    %69 = vector.shape_cast %68 : vector<128xf32> to vector<1x128xf32>
    %70 = vector.broadcast %69 : vector<1x128xf32> to vector<8x128xf32>
    %71 = arith.addf %66, %70 : vector<8x128xf32>
    %72 = math.absf %71 : vector<8x128xf32>
    %cst_36 = arith.constant 0.000000e+00 : f32
    %73 = vector.broadcast %cst_36 : f32 to vector<8x128xf32>
    %74 = arith.subf %73, %72 : vector<8x128xf32>
    %75 = math.exp %74 : vector<8x128xf32>
    %cst_37 = arith.constant 1.000000e+00 : f32
    %76 = vector.broadcast %cst_37 : f32 to vector<8x128xf32>
    %77 = arith.addf %76, %75 : vector<8x128xf32>
    %cst_38 = arith.constant 1.000000e+00 : f32
    %78 = vector.broadcast %cst_38 : f32 to vector<8x128xf32>
    %79 = arith.divf %78, %77 : vector<8x128xf32>
    %cst_39 = arith.constant 0.000000e+00 : f32
    %80 = vector.broadcast %cst_39 : f32 to vector<8x128xf32>
    %81 = arith.cmpf oge, %71, %80 : vector<8x128xf32>
    %cst_40 = arith.constant 1.000000e+00 : f32
    %82 = vector.broadcast %cst_40 : f32 to vector<8x128xf32>
    %83 = arith.subf %82, %79 : vector<8x128xf32>
    %84 = arith.select %81, %79, %83 : vector<8x128xi1>, vector<8x128xf32>
    %85 = arith.mulf %71, %84 : vector<8x128xf32>
    %c3 = arith.constant 3 : index
    %c0_41 = arith.constant 0 : index
    %c0_42 = arith.constant 0 : index
    %86 = vector.load %arg4[%c3, %c0_41, %c0_42] : memref<4x128x128xf32, #tpu.memory_space<vmem>>, vector<1x128x128xf32>
    %87 = vector.shape_cast %86 : vector<1x128x128xf32> to vector<128x128xf32>
    %cst_43 = arith.constant dense<0.000000e+00> : vector<8x128xf32>
    %88 = tpu.matmul %85, %87, %cst_43 {dimension_numbers = #tpu.dot_dimension_numbers<[1], [0], [0], [1], [0, 0, 1, 1], [], []>} : vector<8x128xf32>, vector<128x128xf32>, vector<8x128xf32> -> vector<8x128xf32>
    %c3_44 = arith.constant 3 : index
    %c0_45 = arith.constant 0 : index
    %89 = vector.load %arg5[%c3_44, %c0_45] : memref<4x128xf32, #tpu.memory_space<vmem>>, vector<1x128xf32>
    %90 = vector.shape_cast %89 : vector<1x128xf32> to vector<128xf32>
    %91 = vector.shape_cast %90 : vector<128xf32> to vector<1x128xf32>
    %92 = vector.broadcast %91 : vector<1x128xf32> to vector<8x128xf32>
    %93 = arith.addf %88, %92 : vector<8x128xf32>
    %94 = math.absf %93 : vector<8x128xf32>
    %cst_46 = arith.constant 0.000000e+00 : f32
    %95 = vector.broadcast %cst_46 : f32 to vector<8x128xf32>
    %96 = arith.subf %95, %94 : vector<8x128xf32>
    %97 = math.exp %96 : vector<8x128xf32>
    %cst_47 = arith.constant 1.000000e+00 : f32
    %98 = vector.broadcast %cst_47 : f32 to vector<8x128xf32>
    %99 = arith.addf %98, %97 : vector<8x128xf32>
    %cst_48 = arith.constant 1.000000e+00 : f32
    %100 = vector.broadcast %cst_48 : f32 to vector<8x128xf32>
    %101 = arith.divf %100, %99 : vector<8x128xf32>
    %cst_49 = arith.constant 0.000000e+00 : f32
    %102 = vector.broadcast %cst_49 : f32 to vector<8x128xf32>
    %103 = arith.cmpf oge, %93, %102 : vector<8x128xf32>
    %cst_50 = arith.constant 1.000000e+00 : f32
    %104 = vector.broadcast %cst_50 : f32 to vector<8x128xf32>
    %105 = arith.subf %104, %101 : vector<8x128xf32>
    %106 = arith.select %103, %101, %105 : vector<8x128xi1>, vector<8x128xf32>
    %107 = arith.mulf %93, %106 : vector<8x128xf32>
    %c0_51 = arith.constant 0 : index
    %c0_52 = arith.constant 0 : index
    %108 = vector.load %arg6[%c0_51, %c0_52] : memref<128x128xf32, #tpu.memory_space<vmem>>, vector<128x128xf32>
    %cst_53 = arith.constant dense<0.000000e+00> : vector<8x128xf32>
    %109 = tpu.matmul %107, %108, %cst_53 {dimension_numbers = #tpu.dot_dimension_numbers<[1], [0], [0], [1], [0, 0, 1, 1], [], []>} : vector<8x128xf32>, vector<128x128xf32>, vector<8x128xf32> -> vector<8x128xf32>
    %c0_54 = arith.constant 0 : index
    %c0_55 = arith.constant 0 : index
    %110 = vector.load %arg7[%c0_54, %c0_55] : memref<1x128xf32, #tpu.memory_space<vmem>>, vector<1x128xf32>
    %111 = vector.broadcast %110 : vector<1x128xf32> to vector<8x128xf32>
    %112 = arith.addf %109, %111 : vector<8x128xf32>
    %c0_56 = arith.constant 0 : index
    %c0_57 = arith.constant 0 : index
    %113 = vector.load %arg8[%c0_56, %c0_57] : memref<8x128xf32, #tpu.memory_space<vmem>>, vector<8x128xf32>
    tpu.vector_store %arg8[%c0_56, %c0_57], %112 {strides = array<i32>} : memref<8x128xf32, #tpu.memory_space<vmem>>, vector<8x128xf32>,
    return
  }
  func.func @transform_0(%arg0: i32) -> (i32, i32) {
    %c0_i32 = arith.constant 0 : i32
    %c0_i32_0 = arith.constant 0 : i32
    return %arg0, %c0_i32 : i32, i32
  }
  func.func @transform_1(%arg0: i32) -> (i32, i32) {
    %c0_i32 = arith.constant 0 : i32
    %c0_i32_0 = arith.constant 0 : i32
    %c0_i32_1 = arith.constant 0 : i32
    return %c0_i32, %c0_i32_0 : i32, i32
  }
  func.func @transform_2(%arg0: i32) -> (i32, i32) {
    %c0_i32 = arith.constant 0 : i32
    %c0_i32_0 = arith.constant 0 : i32
    %c0_i32_1 = arith.constant 0 : i32
    return %c0_i32, %c0_i32_0 : i32, i32
  }
  func.func @transform_3(%arg0: i32) -> (i32, i32, i32) {
    %c0_i32 = arith.constant 0 : i32
    %c0_i32_0 = arith.constant 0 : i32
    %c0_i32_1 = arith.constant 0 : i32
    %c0_i32_2 = arith.constant 0 : i32
    return %c0_i32, %c0_i32_0, %c0_i32_1 : i32, i32, i32
  }
  func.func @transform_4(%arg0: i32) -> (i32, i32) {
    %c0_i32 = arith.constant 0 : i32
    %c0_i32_0 = arith.constant 0 : i32
    %c0_i32_1 = arith.constant 0 : i32
    return %c0_i32, %c0_i32_0 : i32, i32
  }
  func.func @transform_5(%arg0: i32) -> (i32, i32) {
    %c0_i32 = arith.constant 0 : i32
    %c0_i32_0 = arith.constant 0 : i32
    %c0_i32_1 = arith.constant 0 : i32
    return %c0_i32, %c0_i32_0 : i32, i32
  }
  func.func @transform_6(%arg0: i32) -> (i32, i32) {
    %c0_i32 = arith.constant 0 : i32
    %c0_i32_0 = arith.constant 0 : i32
    %c0_i32_1 = arith.constant 0 : i32
    return %c0_i32, %c0_i32_0 : i32, i32
  }
  func.func @transform_7(%arg0: i32) -> (i32, i32) {
    %c0_i32 = arith.constant 0 : i32
    %c0_i32_0 = arith.constant 0 : i32
    return %arg0, %c0_i32 : i32, i32
  }
}

</mosaic_0001>

<llo_original>
// kernel: tpu_custom_call.1
$region0: #{tpu_custom_call.1}
  #allocation0 [shape = 'u32[]', space=smem, size = 0x4, offset = 0x4, fixed_abs, tag = 'smem constant byte address 0x4 - core index']
  #allocation1 [shape = 'u32[144,128]{1,0:T(1,128)}', space=vmem, size = 0x12000, scoped, tag = 'internal scratch']
  %s0 = inlined_call_operand.vmem [shape: f32[8,4], index: 0, kind: input, shape index: {}]
  %s1 = inlined_call_operand.vmem [shape: f32[4,128], index: 1, kind: input, shape index: {}]
  %s2 = inlined_call_operand.vmem [shape: f32[1,128], index: 2, kind: input, shape index: {}]
  %s3 = inlined_call_operand.hbm [shape: f32[4,128,128], index: 3, kind: input, shape index: {}]
  %s4 = inlined_call_operand.vmem [shape: f32[4,128], index: 4, kind: input, shape index: {}]
  %s5 = inlined_call_operand.hbm [shape: f32[128,128], index: 5, kind: input, shape index: {}]
  %s6 = inlined_call_operand.vmem [shape: f32[1,128], index: 6, kind: input, shape index: {}]
  %s7 = inlined_call_operand.hbm [shape: f32[8,128], index: 7, kind: output, shape index: {}]
  %s8 = sld [smem:[#allocation0]]
  $region46: #{tpu_custom_call.1} parent=0
    _
  %s10 = ssub.s32 1, %s8
  %s11 = scalar_select 0, %s10, %s8
  $region1: #{tpu_custom_call.1} parent=0
    #allocation2 [shape = 'u8[262144]{0}', space=vmem, size = 0x40000, scoped, tag = 'input window, operand 3, single buffered']
    #allocation3 [shape = 's32[1]{0}', space=sflag, size = 0x4, scoped, tag = 'scoped memory for tpu_custom_call.1']
    #allocation4 [shape = 's32[1]{0}', space=sflag, size = 0x4, scoped, tag = 'scoped memory for tpu_custom_call.1']
    #allocation5 [shape = 'u8[65536]{0}', space=vmem, size = 0x10000, scoped, tag = 'input window, operand 5, single buffered']
    #allocation6 [shape = 's32[1]{0}', space=sflag, size = 0x4, scoped, tag = 'scoped memory for tpu_custom_call.1']
    #allocation7 [shape = 'u8[4096]{0}', space=vmem, size = 0x1000, scoped, tag = 'output window, operand 0, single buffered']
    %12 = vsyncpa [#allocation3], 0
    %13 = vsyncpa [#allocation6], 0
    %14 = vsyncpa [#allocation4], 0
    // Predicated region
    $region2: #{tpu_custom_call.1} parent=1 // pred_check
      _
    $region3: #{tpu_custom_call.1} parent=1 // pred_check_branch
      %16 = sbr.rel (0) target = $region5
    $region4: #{tpu_custom_call.1} parent=1 // pred_region
      _
    $region5: #{tpu_custom_call.1} parent=1 // pred_fallthru
      _
    // Predicated region
    $region6: #{tpu_custom_call.1} parent=1 // pred_check
      _
    $region7: #{tpu_custom_call.1} parent=1 // pred_check_branch
      %18 = sbr.rel (0) target = $region9
    $region8: #{tpu_custom_call.1} parent=1 // pred_region
      _
    $region9: #{tpu_custom_call.1} parent=1 // pred_fallthru
      _
    // Predicated region
    $region10: #{tpu_custom_call.1} parent=1 // pred_check
      _
    $region11: #{tpu_custom_call.1} parent=1 // pred_check_branch
      %20 = sbr.rel (0) target = $region13
    $region12: #{tpu_custom_call.1} parent=1 // pred_region
      _
    $region13: #{tpu_custom_call.1} parent=1 // pred_fallthru
      _
    // Predicated region
    $region14: #{tpu_custom_call.1} parent=1 // pred_check
      _
    $region15: #{tpu_custom_call.1} parent=1 // pred_check_branch
      %22 = sbr.rel (0) target = $region17
    $region16: #{tpu_custom_call.1} parent=1 // pred_region
      %s24 = ssub.s32 8192, 8192
      %25 = vsyncadd [#allocation3], %s24
      %s26 = sshll.u32 [#allocation2], 4
      %s27 = int_to_ptr.vmem [resolvable:$true] %s26
      %32 = dma.hbm_to_vmem [thread:$0]  %s3, 8192, %s27, [#allocation3], 128, 128, 8
    $region17: #{tpu_custom_call.1} parent=1 // pred_fallthru
      _
    // Predicated region
    $region18: #{tpu_custom_call.1} parent=1 // pred_check
      _
    $region19: #{tpu_custom_call.1} parent=1 // pred_check_branch
      %34 = sbr.rel (0) target = $region21
    $region20: #{tpu_custom_call.1} parent=1 // pred_region
      _
    $region21: #{tpu_custom_call.1} parent=1 // pred_fallthru
      _
    // Predicated region
    $region22: #{tpu_custom_call.1} parent=1 // pred_check
      _
    $region23: #{tpu_custom_call.1} parent=1 // pred_check_branch
      %36 = sbr.rel (0) target = $region25
    $region24: #{tpu_custom_call.1} parent=1 // pred_region
      %s38 = ssub.s32 2048, 2048
      %39 = vsyncadd [#allocation6], %s38
      %s40 = sshll.u32 [#allocation5], 4
      %s41 = int_to_ptr.vmem [resolvable:$true] %s40
      %46 = dma.hbm_to_vmem [thread:$0]  %s5, 2048, %s41, [#allocation6], 128, 128, 8
    $region25: #{tpu_custom_call.1} parent=1 // pred_fallthru
      _
    // Predicated region
    $region26: #{tpu_custom_call.1} parent=1 // pred_check
      _
    $region27: #{tpu_custom_call.1} parent=1 // pred_check_branch
      %48 = sbr.rel (0) target = $region29
    $region28: #{tpu_custom_call.1} parent=1 // pred_region
      _
    $region29: #{tpu_custom_call.1} parent=1 // pred_fallthru
      _
    // Predicated region
    $region30: #{tpu_custom_call.1} parent=1 // pred_check
      _
    $region31: #{tpu_custom_call.1} parent=1 // pred_check_branch
      %50 = sbr.rel (0) target = $region33
    $region32: #{tpu_custom_call.1} parent=1 // pred_region
      %51 = dma.done [#allocation3], 8192
    $region33: #{tpu_custom_call.1} parent=1 // pred_fallthru
      _
    // Predicated region
    $region34: #{tpu_custom_call.1} parent=1 // pred_check
      _
    $region35: #{tpu_custom_call.1} parent=1 // pred_check_branch
      %53 = sbr.rel (0) target = $region37
    $region36: #{tpu_custom_call.1} parent=1 // pred_region
      %54 = dma.done [#allocation6], 2048
    $region37: #{tpu_custom_call.1} parent=1 // pred_fallthru
      _
    %v55 = vld [vmem:[%s0] sm:$0xff]
    %v56 = vld [vmem:[%s1] sm:$0xf]
    %v57 = vld [vmem:[%s2] sm:$0x1]
    %v59 = vlaneseq
    %v60 = vshrl.u32 %v59, 7
    %v61 = vsub.s32 0, %v60
    %v62 = vrot.slane %v57, %v61
    %vm64 = vcmask 31744
    %v66 = vsel %vm64, %v55, 0
    %vm68 = vcmask 1043456
    %v70 = vsel %vm68, %v56, 0
    %72 = vmatprep.subr.mxu0 0.0
    %73 = vmatpush1.msra.mxu0 0.0
    %74 = vmatprep.subr.mxu0 0.0
    %75 = vmatpush1.msra.mxu0 0.0
    %76 = vmatprep.subr.mxu0 0.0
    %77 = vmatpush1.msra.mxu0 0.0
    %78 = vmatprep.subr.mxu0 0.0
    %79 = vmatpush1.msra.mxu0 0.0
    %80 = vmatprep.subr.mxu0 0.0
    %81 = vmatpush1.msra.mxu0 0.0
    %82 = vmatprep.subr.mxu0 0.0
    %83 = vmatpush1.msra.mxu0 0.0
    %84 = vmatprep.subr.mxu0 0.0
    %85 = vmatpush1.msra.mxu0 0.0
    %86 = vmatprep.subr.mxu0 0.0
    %87 = vmatpush1.msra.mxu0 0.0
    %88 = vmatprep.subr.mxu0 0.0
    %89 = vmatpush1.msra.mxu0 0.0
    %90 = vmatprep.subr.mxu0 0.0
    %91 = vmatpush1.msra.mxu0 0.0
    %92 = vmatprep.subr.mxu0 0.0
    %93 = vmatpush1.msra.mxu0 0.0
    %94 = vmatprep.subr.mxu0 0.0
    %95 = vmatpush1.msra.mxu0 0.0
    %96 = vmatprep.subr.mxu0 0.0
    %97 = vmatpush1.msra.mxu0 0.0
    %98 = vmatprep.subr.mxu0 0.0
    %99 = vmatpush1.msra.mxu0 0.0
    %100 = vmatprep.subr.mxu0 0.0
    %101 = vmatpush1.msra.mxu0 0.0
    %102 = vmatprep.subr.mxu0 0.0
    %103 = vmatpush1.msra.mxu0 %v70
    %104 = vmatprep.subr.mxu0 0.0
    %105 = vmatpush2.msra.mxu0 0.0
    %106 = vmatprep.subr.mxu0 0.0
    %107 = vmatpush2.msra.mxu0 0.0
    %108 = vmatprep.subr.mxu0 0.0
    %109 = vmatpush2.msra.mxu0 0.0
    %110 = vmatprep.subr.mxu0 0.0
    %111 = vmatpush2.msra.mxu0 0.0
    %112 = vmatprep.subr.mxu0 0.0
    %113 = vmatpush2.msra.mxu0 0.0
    %114 = vmatprep.subr.mxu0 0.0
    %115 = vmatpush2.msra.mxu0 0.0
    %116 = vmatprep.subr.mxu0 0.0
    %117 = vmatpush2.msra.mxu0 0.0
    %118 = vmatprep.subr.mxu0 0.0
    %119 = vmatpush2.msra.mxu0 0.0
    %120 = vmatprep.subr.mxu0 0.0
    %121 = vmatpush2.msra.mxu0 0.0
    %122 = vmatprep.subr.mxu0 0.0
    %123 = vmatpush2.msra.mxu0 0.0
    %124 = vmatprep.subr.mxu0 0.0
    %125 = vmatpush2.msra.mxu0 0.0
    %126 = vmatprep.subr.mxu0 0.0
    %127 = vmatpush2.msra.mxu0 0.0
    %128 = vmatprep.subr.mxu0 0.0
    %129 = vmatpush2.msra.mxu0 0.0
    %130 = vmatprep.subr.mxu0 0.0
    %131 = vmatpush2.msra.mxu0 0.0
    %132 = vmatprep.subr.mxu0 0.0
    %133 = vmatpush2.msra.mxu0 0.0
    %134 = vmatprep.subr.mxu0 0.0
    %135 = vmatpush2.msra.mxu0 0.0
    %136 = vmatprep.mubr.f32.mxu0 0.0
    %137 = vmatmul.mubr.f32.gmra.mxu0 %v66
    %v138 = vpop.f32.mrf.mxu0
    %v139 = vadd.f32 %v62, %v138
    %v140 = vpop.f32.mrf.mxu0
    %141 = vdwg.mxu0
    %v142 = vand.u32 2147483647, %v139
    %v143 = vsub.f32 0.0, %v142
    %v144 = vmul.f32 %v143, 1.442695
    %v145 = vpow.pop %v144
    %v146 = vadd.f32 %v145, 1.0
    %v147 = vrcp.pop %v146
    %v148 = vmul.f32 1.0, %v147
    %vm149 = vcmp.ge.f32.partialorder %v139, 0.0
    %v150 = vsub.f32 1.0, %v148
    %v151 = vsel %vm149, %v148, %v150
    %v152 = vmul.f32 %v139, %v151
    %v153 = vld [vmem:[#allocation2] sm:$0xff]
    %v154 = vld [vmem:[#allocation2 + $0x8] sm:$0xff]
    %v155 = vld [vmem:[#allocation2 + $0x10] sm:$0xff]
    %v156 = vld [vmem:[#allocation2 + $0x18] sm:$0xff]
    %v157 = vld [vmem:[#allocation2 + $0x20] sm:$0xff]
    %v158 = vld [vmem:[#allocation2 + $0x28] sm:$0xff]
    %v159 = vld [vmem:[#allocation2 + $0x30] sm:$0xff]
    %v160 = vld [vmem:[#allocation2 + $0x38] sm:$0xff]
    %v161 = vld [vmem:[#allocation2 + $0x40] sm:$0xff]
    %v162 = vld [vmem:[#allocation2 + $0x48] sm:$0xff]
    %v163 = vld [vmem:[#allocation2 + $0x50] sm:$0xff]
    %v164 = vld [vmem:[#allocation2 + $0x58] sm:$0xff]
    %v165 = vld [vmem:[#allocation2 + $0x60] sm:$0xff]
    %v166 = vld [vmem:[#allocation2 + $0x68] sm:$0xff]
    %v167 = vld [vmem:[#allocation2 + $0x70] sm:$0xff]
    %v168 = vld [vmem:[#allocation2 + $0x78] sm:$0xff]
    %v169 = vld [vmem:[%s4] sm:$0x1]
    %v170 = vlaneseq
    %v171 = vshrl.u32 %v170, 7
    %v172 = vsub.s32 0, %v171
    %v173 = vrot.slane %v169, %v172
    %174 = vmatprep.subr.mxu0 0.0
    %175 = vmatpush1.msra.mxu0 %v168
    %176 = vmatprep.subr.mxu0 0.0
    %177 = vmatpush1.msra.mxu0 %v167
    %178 = vmatprep.subr.mxu0 0.0
    %179 = vmatpush1.msra.mxu0 %v166
    %180 = vmatprep.subr.mxu0 0.0
    %181 = vmatpush1.msra.mxu0 %v165
    %182 = vmatprep.subr.mxu0 0.0
    %183 = vmatpush1.msra.mxu0 %v164
    %184 = vmatprep.subr.mxu0 0.0
    %185 = vmatpush1.msra.mxu0 %v163
    %186 = vmatprep.subr.mxu0 0.0
    %187 = vmatpush1.msra.mxu0 %v162
    %188 = vmatprep.subr.mxu0 0.0
    %189 = vmatpush1.msra.mxu0 %v161
    %190 = vmatprep.subr.mxu0 0.0
    %191 = vmatpush1.msra.mxu0 %v160
    %192 = vmatprep.subr.mxu0 0.0
    %193 = vmatpush1.msra.mxu0 %v159
    %194 = vmatprep.subr.mxu0 0.0
    %195 = vmatpush1.msra.mxu0 %v158
    %196 = vmatprep.subr.mxu0 0.0
    %197 = vmatpush1.msra.mxu0 %v157
    %198 = vmatprep.subr.mxu0 0.0
    %199 = vmatpush1.msra.mxu0 %v156
    %200 = vmatprep.subr.mxu0 0.0
    %201 = vmatpush1.msra.mxu0 %v155
    %202 = vmatprep.subr.mxu0 0.0
    %203 = vmatpush1.msra.mxu0 %v154
    %204 = vmatprep.subr.mxu0 0.0
    %205 = vmatpush1.msra.mxu0 %v153
    %206 = vmatprep.subr.mxu0 0.0
    %207 = vmatpush2.msra.mxu0 0.0
    %208 = vmatprep.subr.mxu0 0.0
    %209 = vmatpush2.msra.mxu0 0.0
    %210 = vmatprep.subr.mxu0 0.0
    %211 = vmatpush2.msra.mxu0 0.0
    %212 = vmatprep.subr.mxu0 0.0
    %213 = vmatpush2.msra.mxu0 0.0
    %214 = vmatprep.subr.mxu0 0.0
    %215 = vmatpush2.msra.mxu0 0.0
    %216 = vmatprep.subr.mxu0 0.0
    %217 = vmatpush2.msra.mxu0 0.0
    %218 = vmatprep.subr.mxu0 0.0
    %219 = vmatpush2.msra.mxu0 0.0
    %220 = vmatprep.subr.mxu0 0.0
    %221 = vmatpush2.msra.mxu0 0.0
    %222 = vmatprep.subr.mxu0 0.0
    %223 = vmatpush2.msra.mxu0 0.0
    %224 = vmatprep.subr.mxu0 0.0
    %225 = vmatpush2.msra.mxu0 0.0
    %226 = vmatprep.subr.mxu0 0.0
    %227 = vmatpush2.msra.mxu0 0.0
    %228 = vmatprep.subr.mxu0 0.0
    %229 = vmatpush2.msra.mxu0 0.0
    %230 = vmatprep.subr.mxu0 0.0
    %231 = vmatpush2.msra.mxu0 0.0
    %232 = vmatprep.subr.mxu0 0.0
    %233 = vmatpush2.msra.mxu0 0.0
    %234 = vmatprep.subr.mxu0 0.0
    %235 = vmatpush2.msra.mxu0 0.0
    %236 = vmatprep.subr.mxu0 0.0
    %237 = vmatpush2.msra.mxu0 0.0
    %238 = vmatprep.mubr.f32.mxu0 0.0
    %239 = vmatmul.mubr.f32.gmra.mxu0 %v152
    %v240 = vpop.f32.mrf.mxu0
    %v241 = vadd.f32 %v173, %v240
    %v242 = vpop.f32.mrf.mxu0
    %243 = vdwg.mxu0
    %v244 = vand.u32 2147483647, %v241
    %v245 = vsub.f32 0.0, %v244
    %v246 = vmul.f32 %v245, 1.442695
    %v247 = vpow.pop %v246
    %v248 = vadd.f32 %v247, 1.0
    %v249 = vrcp.pop %v248
    %v250 = vmul.f32 1.0, %v249
    %vm251 = vcmp.ge.f32.partialorder %v241, 0.0
    %v252 = vsub.f32 1.0, %v250
    %v253 = vsel %vm251, %v250, %v252
    %v254 = vmul.f32 %v241, %v253
    %s255 = scalar_lea.vmem [#allocation2], 128
    %v256 = vld [vmem:[%s255] sm:$0xff]
    %v257 = vld [vmem:[%s255 + $0x8] sm:$0xff]
    %v258 = vld [vmem:[%s255 + $0x10] sm:$0xff]
    %v259 = vld [vmem:[%s255 + $0x18] sm:$0xff]
    %v260 = vld [vmem:[%s255 + $0x20] sm:$0xff]
    %v261 = vld [vmem:[%s255 + $0x28] sm:$0xff]
    %v262 = vld [vmem:[%s255 + $0x30] sm:$0xff]
    %v263 = vld [vmem:[%s255 + $0x38] sm:$0xff]
    %v264 = vld [vmem:[%s255 + $0x40] sm:$0xff]
    %v265 = vld [vmem:[%s255 + $0x48] sm:$0xff]
    %v266 = vld [vmem:[%s255 + $0x50] sm:$0xff]
    %v267 = vld [vmem:[%s255 + $0x58] sm:$0xff]
    %v268 = vld [vmem:[%s255 + $0x60] sm:$0xff]
    %v269 = vld [vmem:[%s255 + $0x68] sm:$0xff]
    %v270 = vld [vmem:[%s255 + $0x70] sm:$0xff]
    %v271 = vld [vmem:[%s255 + $0x78] sm:$0xff]
    %v272 = vld [vmem:[%s4 + $0x1] sm:$0x1]
    %v273 = vlaneseq
    %v274 = vshrl.u32 %v273, 7
    %v275 = vsub.s32 0, %v274
    %v276 = vrot.slane %v272, %v275
    %277 = vmatprep.subr.mxu0 0.0
    %278 = vmatpush1.msra.mxu0 %v271
    %279 = vmatprep.subr.mxu0 0.0
    %280 = vmatpush1.msra.mxu0 %v270
    %281 = vmatprep.subr.mxu0 0.0
    %282 = vmatpush1.msra.mxu0 %v269
    %283 = vmatprep.subr.mxu0 0.0
    %284 = vmatpush1.msra.mxu0 %v268
    %285 = vmatprep.subr.mxu0 0.0
    %286 = vmatpush1.msra.mxu0 %v267
    %287 = vmatprep.subr.mxu0 0.0
    %288 = vmatpush1.msra.mxu0 %v266
    %289 = vmatprep.subr.mxu0 0.0
    %290 = vmatpush1.msra.mxu0 %v265
    %291 = vmatprep.subr.mxu0 0.0
    %292 = vmatpush1.msra.mxu0 %v264
    %293 = vmatprep.subr.mxu0 0.0
    %294 = vmatpush1.msra.mxu0 %v263
    %295 = vmatprep.subr.mxu0 0.0
    %296 = vmatpush1.msra.mxu0 %v262
    %297 = vmatprep.subr.mxu0 0.0
    %298 = vmatpush1.msra.mxu0 %v261
    %299 = vmatprep.subr.mxu0 0.0
    %300 = vmatpush1.msra.mxu0 %v260
    %301 = vmatprep.subr.mxu0 0.0
    %302 = vmatpush1.msra.mxu0 %v259
    %303 = vmatprep.subr.mxu0 0.0
    %304 = vmatpush1.msra.mxu0 %v258
    %305 = vmatprep.subr.mxu0 0.0
    %306 = vmatpush1.msra.mxu0 %v257
    %307 = vmatprep.subr.mxu0 0.0
    %308 = vmatpush1.msra.mxu0 %v256
    %309 = vmatprep.subr.mxu0 0.0
    %310 = vmatpush2.msra.mxu0 0.0
    %311 = vmatprep.subr.mxu0 0.0
    %312 = vmatpush2.msra.mxu0 0.0
    %313 = vmatprep.subr.mxu0 0.0
    %314 = vmatpush2.msra.mxu0 0.0
    %315 = vmatprep.subr.mxu0 0.0
    %316 = vmatpush2.msra.mxu0 0.0
    %317 = vmatprep.subr.mxu0 0.0
    %318 = vmatpush2.msra.mxu0 0.0
    %319 = vmatprep.subr.mxu0 0.0
    %320 = vmatpush2.msra.mxu0 0.0
    %321 = vmatprep.subr.mxu0 0.0
    %322 = vmatpush2.msra.mxu0 0.0
    %323 = vmatprep.subr.mxu0 0.0
    %324 = vmatpush2.msra.mxu0 0.0
    %325 = vmatprep.subr.mxu0 0.0
    %326 = vmatpush2.msra.mxu0 0.0
    %327 = vmatprep.subr.mxu0 0.0
    %328 = vmatpush2.msra.mxu0 0.0
    %329 = vmatprep.subr.mxu0 0.0
    %330 = vmatpush2.msra.mxu0 0.0
    %331 = vmatprep.subr.mxu0 0.0
    %332 = vmatpush2.msra.mxu0 0.0
    %333 = vmatprep.subr.mxu0 0.0
    %334 = vmatpush2.msra.mxu0 0.0
    %335 = vmatprep.subr.mxu0 0.0
    %336 = vmatpush2.msra.mxu0 0.0
    %337 = vmatprep.subr.mxu0 0.0
    %338 = vmatpush2.msra.mxu0 0.0
    %339 = vmatprep.subr.mxu0 0.0
    %340 = vmatpush2.msra.mxu0 0.0
    %341 = vmatprep.mubr.f32.mxu0 0.0
    %342 = vmatmul.mubr.f32.gmra.mxu0 %v254
    %v343 = vpop.f32.mrf.mxu0
    %v344 = vadd.f32 %v276, %v343
    %v345 = vpop.f32.mrf.mxu0
    %346 = vdwg.mxu0
    %v347 = vand.u32 2147483647, %v344
    %v348 = vsub.f32 0.0, %v347
    %v349 = vmul.f32 %v348, 1.442695
    %v350 = vpow.pop %v349
    %v351 = vadd.f32 %v350, 1.0
    %v352 = vrcp.pop %v351
    %v353 = vmul.f32 1.0, %v352
    %vm354 = vcmp.ge.f32.partialorder %v344, 0.0
    %v355 = vsub.f32 1.0, %v353
    %v356 = vsel %vm354, %v353, %v355
    %v357 = vmul.f32 %v344, %v356
    %s358 = scalar_lea.vmem [#allocation2], 256
    %v359 = vld [vmem:[%s358] sm:$0xff]
    %v360 = vld [vmem:[%s358 + $0x8] sm:$0xff]
    %v361 = vld [vmem:[%s358 + $0x10] sm:$0xff]
    %v362 = vld [vmem:[%s358 + $0x18] sm:$0xff]
    %v363 = vld [vmem:[%s358 + $0x20] sm:$0xff]
    %v364 = vld [vmem:[%s358 + $0x28] sm:$0xff]
    %v365 = vld [vmem:[%s358 + $0x30] sm:$0xff]
    %v366 = vld [vmem:[%s358 + $0x38] sm:$0xff]
    %v367 = vld [vmem:[%s358 + $0x40] sm:$0xff]
    %v368 = vld [vmem:[%s358 + $0x48] sm:$0xff]
    %v369 = vld [vmem:[%s358 + $0x50] sm:$0xff]
    %v370 = vld [vmem:[%s358 + $0x58] sm:$0xff]
    %v371 = vld [vmem:[%s358 + $0x60] sm:$0xff]
    %v372 = vld [vmem:[%s358 + $0x68] sm:$0xff]
    %v373 = vld [vmem:[%s358 + $0x70] sm:$0xff]
    %v374 = vld [vmem:[%s358 + $0x78] sm:$0xff]
    %v375 = vld [vmem:[%s4 + $0x2] sm:$0x1]
    %v376 = vlaneseq
    %v377 = vshrl.u32 %v376, 7
    %v378 = vsub.s32 0, %v377
    %v379 = vrot.slane %v375, %v378
    %380 = vmatprep.subr.mxu0 0.0
    %381 = vmatpush1.msra.mxu0 %v374
    %382 = vmatprep.subr.mxu0 0.0
    %383 = vmatpush1.msra.mxu0 %v373
    %384 = vmatprep.subr.mxu0 0.0
    %385 = vmatpush1.msra.mxu0 %v372
    %386 = vmatprep.subr.mxu0 0.0
    %387 = vmatpush1.msra.mxu0 %v371
    %388 = vmatprep.subr.mxu0 0.0
    %389 = vmatpush1.msra.mxu0 %v370
    %390 = vmatprep.subr.mxu0 0.0
    %391 = vmatpush1.msra.mxu0 %v369
    %392 = vmatprep.subr.mxu0 0.0
    %393 = vmatpush1.msra.mxu0 %v368
    %394 = vmatprep.subr.mxu0 0.0
    %395 = vmatpush1.msra.mxu0 %v367
    %396 = vmatprep.subr.mxu0 0.0
    %397 = vmatpush1.msra.mxu0 %v366
    %398 = vmatprep.subr.mxu0 0.0
    %399 = vmatpush1.msra.mxu0 %v365
    %400 = vmatprep.subr.mxu0 0.0
    %401 = vmatpush1.msra.mxu0 %v364
    %402 = vmatprep.subr.mxu0 0.0
    %403 = vmatpush1.msra.mxu0 %v363
    %404 = vmatprep.subr.mxu0 0.0
    %405 = vmatpush1.msra.mxu0 %v362
    %406 = vmatprep.subr.mxu0 0.0
    %407 = vmatpush1.msra.mxu0 %v361
    %408 = vmatprep.subr.mxu0 0.0
    %409 = vmatpush1.msra.mxu0 %v360
    %410 = vmatprep.subr.mxu0 0.0
    %411 = vmatpush1.msra.mxu0 %v359
    %412 = vmatprep.subr.mxu0 0.0
    %413 = vmatpush2.msra.mxu0 0.0
    %414 = vmatprep.subr.mxu0 0.0
    %415 = vmatpush2.msra.mxu0 0.0
    %416 = vmatprep.subr.mxu0 0.0
    %417 = vmatpush2.msra.mxu0 0.0
    %418 = vmatprep.subr.mxu0 0.0
    %419 = vmatpush2.msra.mxu0 0.0
    %420 = vmatprep.subr.mxu0 0.0
    %421 = vmatpush2.msra.mxu0 0.0
    %422 = vmatprep.subr.mxu0 0.0
    %423 = vmatpush2.msra.mxu0 0.0
    %424 = vmatprep.subr.mxu0 0.0
    %425 = vmatpush2.msra.mxu0 0.0
    %426 = vmatprep.subr.mxu0 0.0
    %427 = vmatpush2.msra.mxu0 0.0
    %428 = vmatprep.subr.mxu0 0.0
    %429 = vmatpush2.msra.mxu0 0.0
    %430 = vmatprep.subr.mxu0 0.0
    %431 = vmatpush2.msra.mxu0 0.0
    %432 = vmatprep.subr.mxu0 0.0
    %433 = vmatpush2.msra.mxu0 0.0
    %434 = vmatprep.subr.mxu0 0.0
    %435 = vmatpush2.msra.mxu0 0.0
    %436 = vmatprep.subr.mxu0 0.0
    %437 = vmatpush2.msra.mxu0 0.0
    %438 = vmatprep.subr.mxu0 0.0
    %439 = vmatpush2.msra.mxu0 0.0
    %440 = vmatprep.subr.mxu0 0.0
    %441 = vmatpush2.msra.mxu0 0.0
    %442 = vmatprep.subr.mxu0 0.0
    %443 = vmatpush2.msra.mxu0 0.0
    %444 = vmatprep.mubr.f32.mxu0 0.0
    %445 = vmatmul.mubr.f32.gmra.mxu0 %v357
    %v446 = vpop.f32.mrf.mxu0
    %v447 = vadd.f32 %v379, %v446
    %v448 = vpop.f32.mrf.mxu0
    %449 = vdwg.mxu0
    %v450 = vand.u32 2147483647, %v447
    %v451 = vsub.f32 0.0, %v450
    %v452 = vmul.f32 %v451, 1.442695
    %v453 = vpow.pop %v452
    %v454 = vadd.f32 %v453, 1.0
    %v455 = vrcp.pop %v454
    %v456 = vmul.f32 1.0, %v455
    %vm457 = vcmp.ge.f32.partialorder %v447, 0.0
    %v458 = vsub.f32 1.0, %v456
    %v459 = vsel %vm457, %v456, %v458
    %v460 = vmul.f32 %v447, %v459
    %s461 = scalar_lea.vmem [#allocation2], 384
    %v462 = vld [vmem:[%s461] sm:$0xff]
    %v463 = vld [vmem:[%s461 + $0x8] sm:$0xff]
    %v464 = vld [vmem:[%s461 + $0x10] sm:$0xff]
    %v465 = vld [vmem:[%s461 + $0x18] sm:$0xff]
    %v466 = vld [vmem:[%s461 + $0x20] sm:$0xff]
    %v467 = vld [vmem:[%s461 + $0x28] sm:$0xff]
    %v468 = vld [vmem:[%s461 + $0x30] sm:$0xff]
    %v469 = vld [vmem:[%s461 + $0x38] sm:$0xff]
    %v470 = vld [vmem:[%s461 + $0x40] sm:$0xff]
    %v471 = vld [vmem:[%s461 + $0x48] sm:$0xff]
    %v472 = vld [vmem:[%s461 + $0x50] sm:$0xff]
    %v473 = vld [vmem:[%s461 + $0x58] sm:$0xff]
    %v474 = vld [vmem:[%s461 + $0x60] sm:$0xff]
    %v475 = vld [vmem:[%s461 + $0x68] sm:$0xff]
    %v476 = vld [vmem:[%s461 + $0x70] sm:$0xff]
    %v477 = vld [vmem:[%s461 + $0x78] sm:$0xff]
    %v478 = vld [vmem:[%s4 + $0x3] sm:$0x1]
    %v479 = vlaneseq
    %v480 = vshrl.u32 %v479, 7
    %v481 = vsub.s32 0, %v480
    %v482 = vrot.slane %v478, %v481
    %483 = vmatprep.subr.mxu0 0.0
    %484 = vmatpush1.msra.mxu0 %v477
    %485 = vmatprep.subr.mxu0 0.0
    %486 = vmatpush1.msra.mxu0 %v476
    %487 = vmatprep.subr.mxu0 0.0
    %488 = vmatpush1.msra.mxu0 %v475
    %489 = vmatprep.subr.mxu0 0.0
    %490 = vmatpush1.msra.mxu0 %v474
    %491 = vmatprep.subr.mxu0 0.0
    %492 = vmatpush1.msra.mxu0 %v473
    %493 = vmatprep.subr.mxu0 0.0
    %494 = vmatpush1.msra.mxu0 %v472
    %495 = vmatprep.subr.mxu0 0.0
    %496 = vmatpush1.msra.mxu0 %v471
    %497 = vmatprep.subr.mxu0 0.0
    %498 = vmatpush1.msra.mxu0 %v470
    %499 = vmatprep.subr.mxu0 0.0
    %500 = vmatpush1.msra.mxu0 %v469
    %501 = vmatprep.subr.mxu0 0.0
    %502 = vmatpush1.msra.mxu0 %v468
    %503 = vmatprep.subr.mxu0 0.0
    %504 = vmatpush1.msra.mxu0 %v467
    %505 = vmatprep.subr.mxu0 0.0
    %506 = vmatpush1.msra.mxu0 %v466
    %507 = vmatprep.subr.mxu0 0.0
    %508 = vmatpush1.msra.mxu0 %v465
    %509 = vmatprep.subr.mxu0 0.0
    %510 = vmatpush1.msra.mxu0 %v464
    %511 = vmatprep.subr.mxu0 0.0
    %512 = vmatpush1.msra.mxu0 %v463
    %513 = vmatprep.subr.mxu0 0.0
    %514 = vmatpush1.msra.mxu0 %v462
    %515 = vmatprep.subr.mxu0 0.0
    %516 = vmatpush2.msra.mxu0 0.0
    %517 = vmatprep.subr.mxu0 0.0
    %518 = vmatpush2.msra.mxu0 0.0
    %519 = vmatprep.subr.mxu0 0.0
    %520 = vmatpush2.msra.mxu0 0.0
    %521 = vmatprep.subr.mxu0 0.0
    %522 = vmatpush2.msra.mxu0 0.0
    %523 = vmatprep.subr.mxu0 0.0
    %524 = vmatpush2.msra.mxu0 0.0
    %525 = vmatprep.subr.mxu0 0.0
    %526 = vmatpush2.msra.mxu0 0.0
    %527 = vmatprep.subr.mxu0 0.0
    %528 = vmatpush2.msra.mxu0 0.0
    %529 = vmatprep.subr.mxu0 0.0
    %530 = vmatpush2.msra.mxu0 0.0
    %531 = vmatprep.subr.mxu0 0.0
    %532 = vmatpush2.msra.mxu0 0.0
    %533 = vmatprep.subr.mxu0 0.0
    %534 = vmatpush2.msra.mxu0 0.0
    %535 = vmatprep.subr.mxu0 0.0
    %536 = vmatpush2.msra.mxu0 0.0
    %537 = vmatprep.subr.mxu0 0.0
    %538 = vmatpush2.msra.mxu0 0.0
    %539 = vmatprep.subr.mxu0 0.0
    %540 = vmatpush2.msra.mxu0 0.0
    %541 = vmatprep.subr.mxu0 0.0
    %542 = vmatpush2.msra.mxu0 0.0
    %543 = vmatprep.subr.mxu0 0.0
    %544 = vmatpush2.msra.mxu0 0.0
    %545 = vmatprep.subr.mxu0 0.0
    %546 = vmatpush2.msra.mxu0 0.0
    %547 = vmatprep.mubr.f32.mxu0 0.0
    %548 = vmatmul.mubr.f32.gmra.mxu0 %v460
    %v549 = vpop.f32.mrf.mxu0
    %v550 = vadd.f32 %v482, %v549
    %v551 = vpop.f32.mrf.mxu0
    %552 = vdwg.mxu0
    %v553 = vand.u32 2147483647, %v550
    %v554 = vsub.f32 0.0, %v553
    %v555 = vmul.f32 %v554, 1.442695
    %v556 = vpow.pop %v555
    %v557 = vadd.f32 %v556, 1.0
    %v558 = vrcp.pop %v557
    %v559 = vmul.f32 1.0, %v558
    %vm560 = vcmp.ge.f32.partialorder %v550, 0.0
    %v561 = vsub.f32 1.0, %v559
    %v562 = vsel %vm560, %v559, %v561
    %v563 = vmul.f32 %v550, %v562
    %v564 = vld [vmem:[#allocation5] sm:$0xff]
    %v565 = vld [vmem:[#allocation5 + $0x8] sm:$0xff]
    %v566 = vld [vmem:[#allocation5 + $0x10] sm:$0xff]
    %v567 = vld [vmem:[#allocation5 + $0x18] sm:$0xff]
    %v568 = vld [vmem:[#allocation5 + $0x20] sm:$0xff]
    %v569 = vld [vmem:[#allocation5 + $0x28] sm:$0xff]
    %v570 = vld [vmem:[#allocation5 + $0x30] sm:$0xff]
    %v571 = vld [vmem:[#allocation5 + $0x38] sm:$0xff]
    %v572 = vld [vmem:[#allocation5 + $0x40] sm:$0xff]
    %v573 = vld [vmem:[#allocation5 + $0x48] sm:$0xff]
    %v574 = vld [vmem:[#allocation5 + $0x50] sm:$0xff]
    %v575 = vld [vmem:[#allocation5 + $0x58] sm:$0xff]
    %v576 = vld [vmem:[#allocation5 + $0x60] sm:$0xff]
    %v577 = vld [vmem:[#allocation5 + $0x68] sm:$0xff]
    %v578 = vld [vmem:[#allocation5 + $0x70] sm:$0xff]
    %v579 = vld [vmem:[#allocation5 + $0x78] sm:$0xff]
    %v580 = vld [vmem:[%s6] sm:$0x1]
    %v582 = vlaneseq
    %v583 = vshrl.u32 %v582, 7
    %v584 = vsub.s32 0, %v583
    %v585 = vrot.slane %v580, %v584
    %587 = vmatprep.subr.mxu0 0.0
    %588 = vmatpush1.msra.mxu0 %v579
    %589 = vmatprep.subr.mxu0 0.0
    %590 = vmatpush1.msra.mxu0 %v578
    %591 = vmatprep.subr.mxu0 0.0
    %592 = vmatpush1.msra.mxu0 %v577
    %593 = vmatprep.subr.mxu0 0.0
    %594 = vmatpush1.msra.mxu0 %v576
    %595 = vmatprep.subr.mxu0 0.0
    %596 = vmatpush1.msra.mxu0 %v575
    %597 = vmatprep.subr.mxu0 0.0
    %598 = vmatpush1.msra.mxu0 %v574
    %599 = vmatprep.subr.mxu0 0.0
    %600 = vmatpush1.msra.mxu0 %v573
    %601 = vmatprep.subr.mxu0 0.0
    %602 = vmatpush1.msra.mxu0 %v572
    %603 = vmatprep.subr.mxu0 0.0
    %604 = vmatpush1.msra.mxu0 %v571
    %605 = vmatprep.subr.mxu0 0.0
    %606 = vmatpush1.msra.mxu0 %v570
    %607 = vmatprep.subr.mxu0 0.0
    %608 = vmatpush1.msra.mxu0 %v569
    %609 = vmatprep.subr.mxu0 0.0
    %610 = vmatpush1.msra.mxu0 %v568
    %611 = vmatprep.subr.mxu0 0.0
    %612 = vmatpush1.msra.mxu0 %v567
    %613 = vmatprep.subr.mxu0 0.0
    %614 = vmatpush1.msra.mxu0 %v566
    %615 = vmatprep.subr.mxu0 0.0
    %616 = vmatpush1.msra.mxu0 %v565
    %617 = vmatprep.subr.mxu0 0.0
    %618 = vmatpush1.msra.mxu0 %v564
    %619 = vmatprep.subr.mxu0 0.0
    %620 = vmatpush2.msra.mxu0 0.0
    %621 = vmatprep.subr.mxu0 0.0
    %622 = vmatpush2.msra.mxu0 0.0
    %623 = vmatprep.subr.mxu0 0.0
    %624 = vmatpush2.msra.mxu0 0.0
    %625 = vmatprep.subr.mxu0 0.0
    %626 = vmatpush2.msra.mxu0 0.0
    %627 = vmatprep.subr.mxu0 0.0
    %628 = vmatpush2.msra.mxu0 0.0
    %629 = vmatprep.subr.mxu0 0.0
    %630 = vmatpush2.msra.mxu0 0.0
    %631 = vmatprep.subr.mxu0 0.0
    %632 = vmatpush2.msra.mxu0 0.0
    %633 = vmatprep.subr.mxu0 0.0
    %634 = vmatpush2.msra.mxu0 0.0
    %635 = vmatprep.subr.mxu0 0.0
    %636 = vmatpush2.msra.mxu0 0.0
    %637 = vmatprep.subr.mxu0 0.0
    %638 = vmatpush2.msra.mxu0 0.0
    %639 = vmatprep.subr.mxu0 0.0
    %640 = vmatpush2.msra.mxu0 0.0
    %641 = vmatprep.subr.mxu0 0.0
    %642 = vmatpush2.msra.mxu0 0.0
    %643 = vmatprep.subr.mxu0 0.0
    %644 = vmatpush2.msra.mxu0 0.0
    %645 = vmatprep.subr.mxu0 0.0
    %646 = vmatpush2.msra.mxu0 0.0
    %647 = vmatprep.subr.mxu0 0.0
    %648 = vmatpush2.msra.mxu0 0.0
    %649 = vmatprep.subr.mxu0 0.0
    %650 = vmatpush2.msra.mxu0 0.0
    %651 = vmatprep.mubr.f32.mxu0 0.0
    %652 = vmatmul.mubr.f32.gmra.mxu0 %v563
    %v653 = vpop.f32.mrf.mxu0
    %v654 = vadd.f32 %v585, %v653
    %v655 = vpop.f32.mrf.mxu0
    %656 = vdwg.mxu0
    %657 = vst [vmem:[#allocation7] sm:$0xff] %v654
    // Predicated region
    $region38: #{tpu_custom_call.1} parent=1 // pred_check
      _
    $region39: #{tpu_custom_call.1} parent=1 // pred_check_branch
      %659 = sbr.rel (0) target = $region41
    $region40: #{tpu_custom_call.1} parent=1 // pred_region
      %s661 = ssub.s32 128, 128
      %662 = vsyncadd [#allocation4], %s661
      %s664 = sshll.u32 [#allocation7], 4
      %s665 = int_to_ptr.vmem [resolvable:$true] %s664
      %667 = dma.vmem_to_hbm [thread:$0]  %s665, 128, %s7, [#allocation4]
    $region41: #{tpu_custom_call.1} parent=1 // pred_fallthru
      _
    // Predicated region
    $region42: #{tpu_custom_call.1} parent=1 // pred_check
      _
    $region43: #{tpu_custom_call.1} parent=1 // pred_check_branch
      %669 = sbr.rel (0) target = $region45
    $region44: #{tpu_custom_call.1} parent=1 // pred_region
      %670 = dma.done [#allocation4], 128
    $region45: #{tpu_custom_call.1} parent=1 // pred_fallthru
      _
    %671 = vsyncpa [#allocation3], 1
    %672 = vsyncpa [#allocation6], 1
    %673 = vsyncpa [#allocation4], 1

</llo_original>
